<compile_context>
chip_gen: v7x
topology: tpu7x:2x2x1
jax: 0.10.0
libtpu: 0.0.40
codegen_flags: <defaults>
</compile_context>

<pallas_src>
import jax
import jax.numpy as jnp
import numpy as np
from jax.experimental import pallas as pl
from jax.experimental.pallas import tpu as pltpu

TEMP = 0.5
EPS = 1e-12


def _dot_nt(a, b):
    # a:[M,K] @ b:[N,K]^T -> [M,N] ; the BxB similarity matrices.
    return jax.lax.dot_general(
        a, b, (((1,), (1,)), ((), ())), preferred_element_type=jnp.float32
    )


def _dot_tn(a, b):
    # a:[K,M]^T @ b:[K,N] -> [M,N] ; used for column sums via a ones vector.
    return jax.lax.dot_general(
        a, b, (((0,), (0,)), ((), ())), preferred_element_type=jnp.float32
    )


def _pi_kernel(x_ref, w_ref, b_ref, out_ref):
    # x_ref: [2, B, H] f32   (0 = prot graph_repr, 1 = cmplx graph_repr)
    # w_ref: [6, H, H] bf16  ([in, out] layout; 0..2 prot_ffn, 3..5 cmplx_ffn)
    # b_ref: [6, H]    f32
    def ffn(h, base):
        # h enters already ReLU'd (the Sequential starts with ReLU).
        for l in range(3):
            if l > 0:
                h = jnp.maximum(h, 0.0)
            w = w_ref[base + l]                    # [H, H] bf16
            b = b_ref[pl.ds(base + l, 1), :]       # [1, H] f32
            h = jnp.dot(h.astype(jnp.bfloat16), w,
                        preferred_element_type=jnp.float32) + b
        return h

    def l2norm(v):
        ss = jnp.sum(v * v, axis=-1, keepdims=True)
        # x * rsqrt(max(ss, eps^2)) == x / max(||x||, eps)  (F.normalize, eps=1e-12)
        return v * jax.lax.rsqrt(jnp.maximum(ss, EPS * EPS))

    prot_in = jnp.maximum(x_ref[0], 0.0)
    cmplx_in = jnp.maximum(x_ref[1], 0.0)

    # F.normalize(ffn(...)); the second normalize inside the loss is idempotent -> dropped.
    z = l2norm(ffn(prot_in, 0))     # prot_repr  [B,H]
    az = l2norm(ffn(cmplx_in, 3))   # cmplx_repr [B,H]

    bsz = z.shape[0]
    inv_t = 1.0 / TEMP

    cross = _dot_nt(z, az) * inv_t      # [B,B]: cross[i,j] = z_i . az_j / T
    zz = _dot_nt(z, z) * inv_t          # [B,B]
    aa = _dot_nt(az, az) * inv_t        # [B,B]

    exp_cross = jnp.exp(cross)
    row_sum = jnp.sum(exp_cross, axis=-1, keepdims=True)          # [B,1] sum_j exp(cross[i,j])
    ones_col = jnp.ones((bsz, 1), jnp.float32)
    col_sum = _dot_tn(exp_cross, ones_col)                        # [B,1] sum_i exp(cross[i,j])

    # Exact diagonal corrections (no iota/diag masks): diag(zz)_i = ||z_i||^2 / T etc.
    diag_zz = jnp.sum(z * z, axis=-1, keepdims=True) * inv_t      # [B,1]
    diag_aa = jnp.sum(az * az, axis=-1, keepdims=True) * inv_t    # [B,1]
    negs_aa = jnp.sum(jnp.exp(zz), axis=-1, keepdims=True) - jnp.exp(diag_zz)   # [B,1]
    negs_bb = jnp.sum(jnp.exp(aa), axis=-1, keepdims=True) - jnp.exp(diag_aa)   # [B,1]

    # sum of positive logits over both directions uses the same diag(cross).
    sum_diag = jnp.sum(z * az, keepdims=True) * inv_t             # (1,1)

    # loss_i = log(denom_i) - pos_i  (== -log(exp(pos)/denom))
    loss_ab_sum = jnp.sum(jnp.log(negs_aa + row_sum), keepdims=True)   # (1,1)
    loss_ba_sum = jnp.sum(jnp.log(negs_bb + col_sum), keepdims=True)   # (1,1)

    out_ref[...] = (loss_ab_sum + loss_ba_sum - 2.0 * sum_diag) * (0.5 / bsz)


def pack_params(prot_params, cmplx_params):
    """Stack PyTorch-layout FFN params (W:[out,in], b:(1,H)) into kernel inputs."""
    ws, bs = [], []
    for params in (prot_params, cmplx_params):
        w1, b1, w2, b2, w3, b3 = params
        ws += [w1.T, w2.T, w3.T]                       # pre-transpose to [in, out]
        bs += [b1.reshape(-1), b2.reshape(-1), b3.reshape(-1)]
    w_stack = jnp.stack(ws, axis=0).astype(jnp.bfloat16)   # [6, H, H] bf16
    b_stack = jnp.stack(bs, axis=0).astype(jnp.float32)    # [6, H]    f32
    return w_stack, b_stack


def protein_interface_loss(prot_graph_repr, cmplx_graph_repr, w_stack, b_stack):
    bsz, hidden = prot_graph_repr.shape
    x = jnp.stack([prot_graph_repr, cmplx_graph_repr], axis=0).astype(jnp.float32)  # [2,B,H]

    w_bytes = 6 * hidden * hidden * 2          # bf16 weights
    b_bytes = 6 * hidden * 4
    x_bytes = 2 * bsz * hidden * 4
    inter_bytes = 16 * bsz * hidden * 4 + 8 * bsz * bsz * 4
    vmem_limit = int(min(max(2 * (w_bytes + b_bytes + x_bytes) + inter_bytes + (8 << 20),
                             32 << 20),
                         64 << 20))            # stay within v7x physical VMEM

    cost = pl.CostEstimate(
        flops=12 * bsz * hidden * hidden + 6 * bsz * bsz * hidden + 4 * bsz * bsz,
        transcendentals=3 * bsz * bsz + 6 * bsz,
        bytes_accessed=w_bytes + b_bytes + x_bytes + 4,
    )

    out = pl.pallas_call(
        _pi_kernel,
        out_shape=jax.ShapeDtypeStruct((1, 1), jnp.float32),
        in_specs=[pl.BlockSpec(memory_space=pltpu.MemorySpace.VMEM)] * 3,
        out_specs=pl.BlockSpec(memory_space=pltpu.MemorySpace.VMEM),
        compiler_params=pltpu.CompilerParams(vmem_limit_bytes=vmem_limit),
        cost_estimate=cost,
    )(x, w_stack, b_stack)
    return out[0, 0]


# ----------------------- reference (plain JAX, mirrors PyTorch) -----------------------
def _ref_loss(prot, cmplx, prot_params, cmplx_params, matmul_dtype=None):
    def ffn(x, params):
        w1, b1, w2, b2, w3, b3 = params
        h = x
        for w, b in ((w1, b1), (w2, b2), (w3, b3)):
            h = jnp.maximum(h, 0.0)
            if matmul_dtype is None:
                h = h @ w.T + b
            else:
                h = jnp.dot(h.astype(matmul_dtype), w.T.astype(matmul_dtype),
                            preferred_element_type=jnp.float32) + b
        return h

    def l2norm(x):
        n = jnp.linalg.norm(x, axis=-1, keepdims=True)
        return x / jnp.maximum(n, EPS)

    c = l2norm(ffn(cmplx, cmplx_params))
    p = l2norm(ffn(prot, prot_params))
    z, az = l2norm(p), l2norm(c)        # calculate_contrastive_loss re-normalizes
    bsz = z.shape[0]
    eye = jnp.eye(bsz)

    def one_side(a, b):
        lab = (a @ b.T) / TEMP
        laa = (a @ a.T) / TEMP
        pos = jnp.diag(lab)
        negs = jnp.sum(jnp.exp(laa) * (1.0 - eye), axis=1)
        denom = negs + jnp.sum(jnp.exp(lab), axis=1)
        return -jnp.log(jnp.exp(pos) / denom)

    return jnp.mean(jnp.concatenate([one_side(z, az), one_side(az, z)]))


# ----------------------------- parameter init -----------------------------
def make_ffn_params(key, hidden):
    # PyTorch nn.Linear default init: U(-1/sqrt(in), 1/sqrt(in))
    bound = 1.0 / np.sqrt(hidden)
    keys = jax.random.split(key, 6)
    params = []
    for i in range(3):
        w = jax.random.uniform(keys[2 * i], (hidden, hidden), jnp.float32, -bound, bound)
        b = jax.random.uniform(keys[2 * i + 1], (1, hidden), jnp.float32, -bound, bound)
        params += [w, b]
    return params


if __name__ == "__main__":
    batch, hidden = 8, 32   # small shapes: batch of graphs x block_hidden_size

    key = jax.random.PRNGKey(0)
    k_prot_in, k_cmplx_in, k_prot_ffn, k_cmplx_ffn = jax.random.split(key, 4)

    # TODO(synk): PredictionModel backbone (GNN message passing) is external; its
    #             graph_repr outputs are supplied directly as kernel inputs.
    prot_graph_repr = jax.random.normal(k_prot_in, (batch, hidden), jnp.float32)
    cmplx_graph_repr = jax.random.normal(k_cmplx_in, (batch, hidden), jnp.float32)

    prot_params = make_ffn_params(k_prot_ffn, hidden)
    cmplx_params = make_ffn_params(k_cmplx_ffn, hidden)

    w_stack, b_stack = pack_params(prot_params, cmplx_params)

    loss = protein_interface_loss(prot_graph_repr, cmplx_graph_repr, w_stack, b_stack)
    loss = float(jax.block_until_ready(loss))

    # bf16-weight reference (same quantization as the kernel) -> tight tolerance
    ref_bf16 = float(jax.block_until_ready(
        _ref_loss(prot_graph_repr, cmplx_graph_repr, prot_params, cmplx_params,
                  matmul_dtype=jnp.bfloat16)))
    # exact f32 reference (PyTorch mirror) -> tolerance covers bf16 weight quantization
    ref_f32 = float(jax.block_until_ready(
        _ref_loss(prot_graph_repr, cmplx_graph_repr, prot_params, cmplx_params)))

    assert np.isfinite(loss)
    assert np.allclose(loss, ref_bf16, rtol=2e-3, atol=2e-3), (loss, ref_bf16)
    assert np.allclose(loss, ref_f32, rtol=6e-2, atol=6e-2), (loss, ref_f32)
    print("KERNEL_OK")
</pallas_src>

<mosaic_0001>
module attributes {stable_mosaic.version = 11 : i64} {
  func.func @_pi_kernel(%arg0: memref<2x8x32xf32, #tpu.memory_space<vmem>>, %arg1: memref<6x32x32xbf16, #tpu.memory_space<vmem>>, %arg2: memref<6x32xf32, #tpu.memory_space<vmem>>, %arg3: memref<1x1xf32, #tpu.memory_space<vmem>>) attributes {dimension_semantics = [], scalar_prefetch = 0 : i64, scratch_operands = 0 : i64, tpu.core_type = #tpu.core_type<tc>} {
    %c0 = arith.constant 0 : index
    %c0_0 = arith.constant 0 : index
    %c0_1 = arith.constant 0 : index
    %0 = vector.load %arg0[%c0, %c0_0, %c0_1] : memref<2x8x32xf32, #tpu.memory_space<vmem>>, vector<1x8x32xf32>
    %1 = vector.shape_cast %0 : vector<1x8x32xf32> to vector<8x32xf32>
    %cst = arith.constant 0.000000e+00 : f32
    %2 = vector.broadcast %cst : f32 to vector<8x32xf32>
    %3 = arith.maximumf %1, %2 : vector<8x32xf32>
    %c1 = arith.constant 1 : index
    %c0_2 = arith.constant 0 : index
    %c0_3 = arith.constant 0 : index
    %4 = vector.load %arg0[%c1, %c0_2, %c0_3] : memref<2x8x32xf32, #tpu.memory_space<vmem>>, vector<1x8x32xf32>
    %5 = vector.shape_cast %4 : vector<1x8x32xf32> to vector<8x32xf32>
    %cst_4 = arith.constant 0.000000e+00 : f32
    %6 = vector.broadcast %cst_4 : f32 to vector<8x32xf32>
    %7 = arith.maximumf %5, %6 : vector<8x32xf32>
    %c0_5 = arith.constant 0 : index
    %c0_6 = arith.constant 0 : index
    %c0_7 = arith.constant 0 : index
    %8 = vector.load %arg1[%c0_5, %c0_6, %c0_7] : memref<6x32x32xbf16, #tpu.memory_space<vmem>>, vector<1x32x32xbf16>
    %9 = vector.shape_cast %8 : vector<1x32x32xbf16> to vector<32x32xbf16>
    %c0_8 = arith.constant 0 : index
    %c0_9 = arith.constant 0 : index
    %10 = vector.load %arg2[%c0_8, %c0_9] : memref<6x32xf32, #tpu.memory_space<vmem>>, vector<1x32xf32>
    %11 = arith.truncf %3 : vector<8x32xf32> to vector<8x32xbf16>
    %cst_10 = arith.constant dense<0.000000e+00> : vector<8x32xf32>
    %12 = tpu.matmul %11, %9, %cst_10 {dimension_numbers = #tpu.dot_dimension_numbers<[1], [0], [0], [1], [0, 0, 1, 1], [], []>} : vector<8x32xbf16>, vector<32x32xbf16>, vector<8x32xf32> -> vector<8x32xf32>
    %13 = vector.broadcast %10 : vector<1x32xf32> to vector<8x32xf32>
    %14 = arith.addf %12, %13 : vector<8x32xf32>
    %cst_11 = arith.constant 0.000000e+00 : f32
    %15 = vector.broadcast %cst_11 : f32 to vector<8x32xf32>
    %16 = arith.maximumf %14, %15 : vector<8x32xf32>
    %c1_12 = arith.constant 1 : index
    %c0_13 = arith.constant 0 : index
    %c0_14 = arith.constant 0 : index
    %17 = vector.load %arg1[%c1_12, %c0_13, %c0_14] : memref<6x32x32xbf16, #tpu.memory_space<vmem>>, vector<1x32x32xbf16>
    %18 = vector.shape_cast %17 : vector<1x32x32xbf16> to vector<32x32xbf16>
    %c1_15 = arith.constant 1 : index
    %c0_16 = arith.constant 0 : index
    %19 = vector.load %arg2[%c1_15, %c0_16] : memref<6x32xf32, #tpu.memory_space<vmem>>, vector<1x32xf32>
    %20 = arith.truncf %16 : vector<8x32xf32> to vector<8x32xbf16>
    %cst_17 = arith.constant dense<0.000000e+00> : vector<8x32xf32>
    %21 = tpu.matmul %20, %18, %cst_17 {dimension_numbers = #tpu.dot_dimension_numbers<[1], [0], [0], [1], [0, 0, 1, 1], [], []>} : vector<8x32xbf16>, vector<32x32xbf16>, vector<8x32xf32> -> vector<8x32xf32>
    %22 = vector.broadcast %19 : vector<1x32xf32> to vector<8x32xf32>
    %23 = arith.addf %21, %22 : vector<8x32xf32>
    %cst_18 = arith.constant 0.000000e+00 : f32
    %24 = vector.broadcast %cst_18 : f32 to vector<8x32xf32>
    %25 = arith.maximumf %23, %24 : vector<8x32xf32>
    %c2 = arith.constant 2 : index
    %c0_19 = arith.constant 0 : index
    %c0_20 = arith.constant 0 : index
    %26 = vector.load %arg1[%c2, %c0_19, %c0_20] : memref<6x32x32xbf16, #tpu.memory_space<vmem>>, vector<1x32x32xbf16>
    %27 = vector.shape_cast %26 : vector<1x32x32xbf16> to vector<32x32xbf16>
    %c2_21 = arith.constant 2 : index
    %c0_22 = arith.constant 0 : index
    %28 = vector.load %arg2[%c2_21, %c0_22] : memref<6x32xf32, #tpu.memory_space<vmem>>, vector<1x32xf32>
    %29 = arith.truncf %25 : vector<8x32xf32> to vector<8x32xbf16>
    %cst_23 = arith.constant dense<0.000000e+00> : vector<8x32xf32>
    %30 = tpu.matmul %29, %27, %cst_23 {dimension_numbers = #tpu.dot_dimension_numbers<[1], [0], [0], [1], [0, 0, 1, 1], [], []>} : vector<8x32xbf16>, vector<32x32xbf16>, vector<8x32xf32> -> vector<8x32xf32>
    %31 = vector.broadcast %28 : vector<1x32xf32> to vector<8x32xf32>
    %32 = arith.addf %30, %31 : vector<8x32xf32>
    %33 = arith.mulf %32, %32 : vector<8x32xf32>
    %cst_24 = arith.constant dense<0.000000e+00> : vector<8xf32>
    %34 = vector.multi_reduction <add>, %33, %cst_24 [1] : vector<8x32xf32> to vector<8xf32>
    %35 = vector.shape_cast %34 : vector<8xf32> to vector<8x1xf32>
    %cst_25 = arith.constant 1.000000e-24 : f32
    %36 = vector.broadcast %cst_25 : f32 to vector<8x1xf32>
    %37 = arith.maximumf %35, %36 : vector<8x1xf32>
    %38 = math.rsqrt %37 : vector<8x1xf32>
    %39 = vector.broadcast %38 : vector<8x1xf32> to vector<8x32xf32>
    %40 = arith.mulf %32, %39 : vector<8x32xf32>
    %c3 = arith.constant 3 : index
    %c0_26 = arith.constant 0 : index
    %c0_27 = arith.constant 0 : index
    %41 = vector.load %arg1[%c3, %c0_26, %c0_27] : memref<6x32x32xbf16, #tpu.memory_space<vmem>>, vector<1x32x32xbf16>
    %42 = vector.shape_cast %41 : vector<1x32x32xbf16> to vector<32x32xbf16>
    %c3_28 = arith.constant 3 : index
    %c0_29 = arith.constant 0 : index
    %43 = vector.load %arg2[%c3_28, %c0_29] : memref<6x32xf32, #tpu.memory_space<vmem>>, vector<1x32xf32>
    %44 = arith.truncf %7 : vector<8x32xf32> to vector<8x32xbf16>
    %cst_30 = arith.constant dense<0.000000e+00> : vector<8x32xf32>
    %45 = tpu.matmul %44, %42, %cst_30 {dimension_numbers = #tpu.dot_dimension_numbers<[1], [0], [0], [1], [0, 0, 1, 1], [], []>} : vector<8x32xbf16>, vector<32x32xbf16>, vector<8x32xf32> -> vector<8x32xf32>
    %46 = vector.broadcast %43 : vector<1x32xf32> to vector<8x32xf32>
    %47 = arith.addf %45, %46 : vector<8x32xf32>
    %cst_31 = arith.constant 0.000000e+00 : f32
    %48 = vector.broadcast %cst_31 : f32 to vector<8x32xf32>
    %49 = arith.maximumf %47, %48 : vector<8x32xf32>
    %c4 = arith.constant 4 : index
    %c0_32 = arith.constant 0 : index
    %c0_33 = arith.constant 0 : index
    %50 = vector.load %arg1[%c4, %c0_32, %c0_33] : memref<6x32x32xbf16, #tpu.memory_space<vmem>>, vector<1x32x32xbf16>
    %51 = vector.shape_cast %50 : vector<1x32x32xbf16> to vector<32x32xbf16>
    %c4_34 = arith.constant 4 : index
    %c0_35 = arith.constant 0 : index
    %52 = vector.load %arg2[%c4_34, %c0_35] : memref<6x32xf32, #tpu.memory_space<vmem>>, vector<1x32xf32>
    %53 = arith.truncf %49 : vector<8x32xf32> to vector<8x32xbf16>
    %cst_36 = arith.constant dense<0.000000e+00> : vector<8x32xf32>
    %54 = tpu.matmul %53, %51, %cst_36 {dimension_numbers = #tpu.dot_dimension_numbers<[1], [0], [0], [1], [0, 0, 1, 1], [], []>} : vector<8x32xbf16>, vector<32x32xbf16>, vector<8x32xf32> -> vector<8x32xf32>
    %55 = vector.broadcast %52 : vector<1x32xf32> to vector<8x32xf32>
    %56 = arith.addf %54, %55 : vector<8x32xf32>
    %cst_37 = arith.constant 0.000000e+00 : f32
    %57 = vector.broadcast %cst_37 : f32 to vector<8x32xf32>
    %58 = arith.maximumf %56, %57 : vector<8x32xf32>
    %c5 = arith.constant 5 : index
    %c0_38 = arith.constant 0 : index
    %c0_39 = arith.constant 0 : index
    %59 = vector.load %arg1[%c5, %c0_38, %c0_39] : memref<6x32x32xbf16, #tpu.memory_space<vmem>>, vector<1x32x32xbf16>
    %60 = vector.shape_cast %59 : vector<1x32x32xbf16> to vector<32x32xbf16>
    %c5_40 = arith.constant 5 : index
    %c0_41 = arith.constant 0 : index
    %61 = vector.load %arg2[%c5_40, %c0_41] : memref<6x32xf32, #tpu.memory_space<vmem>>, vector<1x32xf32>
    %62 = arith.truncf %58 : vector<8x32xf32> to vector<8x32xbf16>
    %cst_42 = arith.constant dense<0.000000e+00> : vector<8x32xf32>
    %63 = tpu.matmul %62, %60, %cst_42 {dimension_numbers = #tpu.dot_dimension_numbers<[1], [0], [0], [1], [0, 0, 1, 1], [], []>} : vector<8x32xbf16>, vector<32x32xbf16>, vector<8x32xf32> -> vector<8x32xf32>
    %64 = vector.broadcast %61 : vector<1x32xf32> to vector<8x32xf32>
    %65 = arith.addf %63, %64 : vector<8x32xf32>
    %66 = arith.mulf %65, %65 : vector<8x32xf32>
    %cst_43 = arith.constant dense<0.000000e+00> : vector<8xf32>
    %67 = vector.multi_reduction <add>, %66, %cst_43 [1] : vector<8x32xf32> to vector<8xf32>
    %68 = vector.shape_cast %67 : vector<8xf32> to vector<8x1xf32>
    %cst_44 = arith.constant 1.000000e-24 : f32
    %69 = vector.broadcast %cst_44 : f32 to vector<8x1xf32>
    %70 = arith.maximumf %68, %69 : vector<8x1xf32>
    %71 = math.rsqrt %70 : vector<8x1xf32>
    %72 = vector.broadcast %71 : vector<8x1xf32> to vector<8x32xf32>
    %73 = arith.mulf %65, %72 : vector<8x32xf32>
    %cst_45 = arith.constant dense<0.000000e+00> : vector<8x8xf32>
    %74 = tpu.matmul %40, %73, %cst_45 {dimension_numbers = #tpu.dot_dimension_numbers<[1], [1], [0], [0], [0, 0, 1, 0], [], []>} : vector<8x32xf32>, vector<8x32xf32>, vector<8x8xf32> -> vector<8x8xf32>
    %cst_46 = arith.constant 2.000000e+00 : f32
    %75 = vector.broadcast %cst_46 : f32 to vector<8x8xf32>
    %76 = arith.mulf %74, %75 : vector<8x8xf32>
    %cst_47 = arith.constant dense<0.000000e+00> : vector<8x8xf32>
    %77 = tpu.matmul %40, %40, %cst_47 {dimension_numbers = #tpu.dot_dimension_numbers<[1], [1], [0], [0], [0, 0, 1, 0], [], []>} : vector<8x32xf32>, vector<8x32xf32>, vector<8x8xf32> -> vector<8x8xf32>
    %cst_48 = arith.constant 2.000000e+00 : f32
    %78 = vector.broadcast %cst_48 : f32 to vector<8x8xf32>
    %79 = arith.mulf %77, %78 : vector<8x8xf32>
    %cst_49 = arith.constant dense<0.000000e+00> : vector<8x8xf32>
    %80 = tpu.matmul %73, %73, %cst_49 {dimension_numbers = #tpu.dot_dimension_numbers<[1], [1], [0], [0], [0, 0, 1, 0], [], []>} : vector<8x32xf32>, vector<8x32xf32>, vector<8x8xf32> -> vector<8x8xf32>
    %cst_50 = arith.constant 2.000000e+00 : f32
    %81 = vector.broadcast %cst_50 : f32 to vector<8x8xf32>
    %82 = arith.mulf %80, %81 : vector<8x8xf32>
    %83 = math.exp %76 : vector<8x8xf32>
    %cst_51 = arith.constant dense<0.000000e+00> : vector<8xf32>
    %84 = vector.multi_reduction <add>, %83, %cst_51 [1] : vector<8x8xf32> to vector<8xf32>
    %85 = vector.shape_cast %84 : vector<8xf32> to vector<8x1xf32>
    %cst_52 = arith.constant 1.000000e+00 : f32
    %86 = vector.broadcast %cst_52 : f32 to vector<8x1xf32>
    %cst_53 = arith.constant dense<0.000000e+00> : vector<8x1xf32>
    %87 = tpu.matmul %83, %86, %cst_53 {dimension_numbers = #tpu.dot_dimension_numbers<[0], [0], [1], [1], [0, 1, 1, 1], [], []>} : vector<8x8xf32>, vector<8x1xf32>, vector<8x1xf32> -> vector<8x1xf32>
    %88 = arith.mulf %40, %40 : vector<8x32xf32>
    %cst_54 = arith.constant dense<0.000000e+00> : vector<8xf32>
    %89 = vector.multi_reduction <add>, %88, %cst_54 [1] : vector<8x32xf32> to vector<8xf32>
    %90 = vector.shape_cast %89 : vector<8xf32> to vector<8x1xf32>
    %cst_55 = arith.constant 2.000000e+00 : f32
    %91 = vector.broadcast %cst_55 : f32 to vector<8x1xf32>
    %92 = arith.mulf %90, %91 : vector<8x1xf32>
    %93 = arith.mulf %73, %73 : vector<8x32xf32>
    %cst_56 = arith.constant dense<0.000000e+00> : vector<8xf32>
    %94 = vector.multi_reduction <add>, %93, %cst_56 [1] : vector<8x32xf32> to vector<8xf32>
    %95 = vector.shape_cast %94 : vector<8xf32> to vector<8x1xf32>
    %cst_57 = arith.constant 2.000000e+00 : f32
    %96 = vector.broadcast %cst_57 : f32 to vector<8x1xf32>
    %97 = arith.mulf %95, %96 : vector<8x1xf32>
    %98 = math.exp %79 : vector<8x8xf32>
    %cst_58 = arith.constant dense<0.000000e+00> : vector<8xf32>
    %99 = vector.multi_reduction <add>, %98, %cst_58 [1] : vector<8x8xf32> to vector<8xf32>
    %100 = vector.shape_cast %99 : vector<8xf32> to vector<8x1xf32>
    %101 = math.exp %92 : vector<8x1xf32>
    %102 = arith.subf %100, %101 : vector<8x1xf32>
    %103 = math.exp %82 : vector<8x8xf32>
    %cst_59 = arith.constant dense<0.000000e+00> : vector<8xf32>
    %104 = vector.multi_reduction <add>, %103, %cst_59 [1] : vector<8x8xf32> to vector<8xf32>
    %105 = vector.shape_cast %104 : vector<8xf32> to vector<8x1xf32>
    %106 = math.exp %97 : vector<8x1xf32>
    %107 = arith.subf %105, %106 : vector<8x1xf32>
    %108 = arith.mulf %40, %73 : vector<8x32xf32>
    %109 = vector.shape_cast %108 : vector<8x32xf32> to vector<1x8x32xf32>
    %cst_60 = arith.constant dense<0.000000e+00> : vector<1xf32>
    %110 = vector.multi_reduction <add>, %109, %cst_60 [1, 2] : vector<1x8x32xf32> to vector<1xf32>
    %111 = vector.shape_cast %110 : vector<1xf32> to vector<1x1x1xf32>
    %112 = vector.extract %111[0, 0, 0] : f32 from vector<1x1x1xf32>
    %113 = vector.broadcast %112 : f32 to vector<1x1xf32>
    %cst_61 = arith.constant 2.000000e+00 : f32
    %114 = vector.broadcast %cst_61 : f32 to vector<1x1xf32>
    %115 = arith.mulf %113, %114 : vector<1x1xf32>
    %116 = arith.addf %102, %85 : vector<8x1xf32>
    %117 = math.log %116 : vector<8x1xf32>
    %118 = vector.shape_cast %117 : vector<8x1xf32> to vector<1x8x1xf32>
    %cst_62 = arith.constant dense<0.000000e+00> : vector<1xf32>
    %119 = vector.multi_reduction <add>, %118, %cst_62 [1, 2] : vector<1x8x1xf32> to vector<1xf32>
    %120 = vector.shape_cast %119 : vector<1xf32> to vector<1x1x1xf32>
    %121 = vector.extract %120[0, 0, 0] : f32 from vector<1x1x1xf32>
    %122 = vector.broadcast %121 : f32 to vector<1x1xf32>
    %123 = arith.addf %107, %87 : vector<8x1xf32>
    %124 = math.log %123 : vector<8x1xf32>
    %125 = vector.shape_cast %124 : vector<8x1xf32> to vector<1x8x1xf32>
    %cst_63 = arith.constant dense<0.000000e+00> : vector<1xf32>
    %126 = vector.multi_reduction <add>, %125, %cst_63 [1, 2] : vector<1x8x1xf32> to vector<1xf32>
    %127 = vector.shape_cast %126 : vector<1xf32> to vector<1x1x1xf32>
    %128 = vector.extract %127[0, 0, 0] : f32 from vector<1x1x1xf32>
    %129 = vector.broadcast %128 : f32 to vector<1x1xf32>
    %130 = arith.addf %122, %129 : vector<1x1xf32>
    %cst_64 = arith.constant 2.000000e+00 : f32
    %131 = vector.broadcast %cst_64 : f32 to vector<1x1xf32>
    %132 = arith.mulf %131, %115 : vector<1x1xf32>
    %133 = arith.subf %130, %132 : vector<1x1xf32>
    %cst_65 = arith.constant 6.250000e-02 : f32
    %134 = vector.broadcast %cst_65 : f32 to vector<1x1xf32>
    %135 = arith.mulf %133, %134 : vector<1x1xf32>
    %c0_66 = arith.constant 0 : index
    %c0_67 = arith.constant 0 : index
    %136 = vector.load %arg3[%c0_66, %c0_67] : memref<1x1xf32, #tpu.memory_space<vmem>>, vector<1x1xf32>
    tpu.vector_store %arg3[%c0_66, %c0_67], %135 {strides = array<i32>} : memref<1x1xf32, #tpu.memory_space<vmem>>, vector<1x1xf32>,
    return
  }
}

</mosaic_0001>

<llo_original>
// kernel: tpu_custom_call.1
$region0: #{tpu_custom_call.1}
  #allocation0 [shape = 'u32[]', space=smem, size = 0x4, offset = 0x4, fixed_abs, tag = 'smem constant byte address 0x4 - core index']
  #allocation1 [shape = 'u32[144,128]{1,0:T(1,128)}', space=vmem, size = 0x12000, scoped, tag = 'internal scratch']
  %s0 = inlined_call_operand.hbm [shape: f32[2,8,32], index: 0, kind: input, shape index: {}]
  %s1 = inlined_call_operand.hbm [shape: bf16[6,32,32], index: 1, kind: input, shape index: {}]
  %s2 = inlined_call_operand.hbm [shape: f32[6,32], index: 2, kind: input, shape index: {}]
  %s3 = inlined_call_operand.hbm [shape: f32[1,1], index: 3, kind: output, shape index: {}]
  %s4 = sld [smem:[#allocation0]]
  $region34: #{tpu_custom_call.1} parent=0
    _
  %s6 = ssub.s32 1, %s4
  %s7 = scalar_select 0, %s6, %s4
  $region1: #{tpu_custom_call.1} parent=0
    #allocation2 [shape = 'u8[8192]{0}', space=vmem, size = 0x2000, scoped, tag = 'input window, operand 0, single buffered']
    #allocation3 [shape = 's32[1]{0}', space=sflag, size = 0x4, scoped, tag = 'scoped memory for tpu_custom_call.1']
    #allocation4 [shape = 's32[1]{0}', space=sflag, size = 0x4, scoped, tag = 'scoped memory for tpu_custom_call.1']
    #allocation5 [shape = 'u8[49152]{0}', space=vmem, size = 0xc000, scoped, tag = 'input window, operand 1, single buffered']
    #allocation6 [shape = 's32[1]{0}', space=sflag, size = 0x4, scoped, tag = 'scoped memory for tpu_custom_call.1']
    #allocation7 [shape = 'u8[4096]{0}', space=vmem, size = 0x1000, scoped, tag = 'input window, operand 2, single buffered']
    #allocation8 [shape = 'u8[512]{0}', space=vmem, size = 0x400, scoped, tag = 'output window, operand 0, single buffered']
    %8 = vsyncpa [#allocation3], 0
    %9 = vsyncpa [#allocation6], 0
    %10 = vsyncpa [#allocation4], 0
    // Predicated region
    $region2: #{tpu_custom_call.1} parent=1 // pred_check
      _
    $region3: #{tpu_custom_call.1} parent=1 // pred_check_branch
      %12 = sbr.rel (0) target = $region5
    $region4: #{tpu_custom_call.1} parent=1 // pred_region
      %s14 = ssub.s32 256, 256
      %15 = vsyncadd [#allocation3], %s14
      %s16 = sshll.u32 [#allocation2], 4
      %s17 = int_to_ptr.vmem [resolvable:$true] %s16
      %22 = dma.hbm_to_vmem [thread:$0]  %s0, 256, %s17, [#allocation3], 128, 128, 8
    $region5: #{tpu_custom_call.1} parent=1 // pred_fallthru
      _
    // Predicated region
    $region6: #{tpu_custom_call.1} parent=1 // pred_check
      _
    $region7: #{tpu_custom_call.1} parent=1 // pred_check_branch
      %24 = sbr.rel (0) target = $region9
    $region8: #{tpu_custom_call.1} parent=1 // pred_region
      %s26 = ssub.s32 1536, 1536
      %27 = vsyncadd [#allocation6], %s26
      %s28 = sshll.u32 [#allocation5], 4
      %s29 = int_to_ptr.vmem [resolvable:$true] %s28
      %34 = dma.hbm_to_vmem [thread:$0]  %s1, 1536, %s29, [#allocation6], 64, 64, 4
    $region9: #{tpu_custom_call.1} parent=1 // pred_fallthru
      _
    // Predicated region
    $region10: #{tpu_custom_call.1} parent=1 // pred_check
      _
    $region11: #{tpu_custom_call.1} parent=1 // pred_check_branch
      %36 = sbr.rel (0) target = $region13
    $region12: #{tpu_custom_call.1} parent=1 // pred_region
      %s38 = ssub.s32 128, 128
      %39 = vsyncadd [#allocation6], %s38
      %s41 = sshll.u32 [#allocation7], 4
      %s42 = int_to_ptr.vmem [resolvable:$true] %s41
      %44 = dma.hbm_to_vmem [thread:$0]  %s2, 128, %s42, [#allocation6]
    $region13: #{tpu_custom_call.1} parent=1 // pred_fallthru
      _
    // Predicated region
    $region14: #{tpu_custom_call.1} parent=1 // pred_check
      _
    $region15: #{tpu_custom_call.1} parent=1 // pred_check_branch
      %46 = sbr.rel (0) target = $region17
    $region16: #{tpu_custom_call.1} parent=1 // pred_region
      %47 = dma.done [#allocation3], 256
    $region17: #{tpu_custom_call.1} parent=1 // pred_fallthru
      _
    // Predicated region
    $region18: #{tpu_custom_call.1} parent=1 // pred_check
      _
    $region19: #{tpu_custom_call.1} parent=1 // pred_check_branch
      %49 = sbr.rel (0) target = $region21
    $region20: #{tpu_custom_call.1} parent=1 // pred_region
      %50 = dma.done [#allocation6], 1536
    $region21: #{tpu_custom_call.1} parent=1 // pred_fallthru
      _
    // Predicated region
    $region22: #{tpu_custom_call.1} parent=1 // pred_check
      _
    $region23: #{tpu_custom_call.1} parent=1 // pred_check_branch
      %52 = sbr.rel (0) target = $region25
    $region24: #{tpu_custom_call.1} parent=1 // pred_region
      %53 = dma.done [#allocation6], 128
    $region25: #{tpu_custom_call.1} parent=1 // pred_fallthru
      _
    %v55 = vld [vmem:[#allocation2] sm:$0xff]
    %v56 = vmax.f32 %v55, 0.0
    %s57 = scalar_lea.vmem [#allocation2], 8
    %v58 = vld [vmem:[%s57] sm:$0xff]
    %v59 = vmax.f32 %v58, 0.0
    %v60 = vld [vmem:[#allocation5] sm:$0xf]
    %v61 = vld [vmem:[#allocation5 + $0x4] sm:$0xf]
    %v62 = vld [vmem:[#allocation5 + $0x8] sm:$0xf]
    %v63 = vld [vmem:[#allocation5 + $0xc] sm:$0xf]
    %v64 = vld [vmem:[#allocation7] sm:$0x1]
    %v65 = vpack.c.bf16 %v56, %v56
    %v66 = vlaneseq
    %v67 = vshrl.u32 %v66, 7
    %v68 = vsub.s32 0, %v67
    %v69 = vrot.slane %v64, %v68
    %v74 = vunpack.c.l.b16 %v60
    %v75 = vunpack.c.l.b16 %v61
    %v76 = vunpack.c.l.b16 %v62
    %v77 = vunpack.c.l.b16 %v63
    %v78 = vpack.c.b16 %v75, %v74
    %v79 = vpack.c.b16 %v77, %v76
    %vm82 = vcmask 261120
    %v84 = vsel %vm82, %v65, 0
    %86 = vmatprep.subr.bf16.mxu0 0
    %87 = vmatpush1.bf16.msra.mxu0 %v78
    %88 = vmatprep.subr.bf16.mxu0 0
    %89 = vmatpush1.bf16.msra.mxu0 %v79
    %90 = vmatprep.subr.bf16.mxu0 0
    %91 = vmatpush1.bf16.msra.mxu0 0
    %92 = vmatprep.subr.bf16.mxu0 0
    %93 = vmatpush1.bf16.msra.mxu0 0
    %94 = vmatprep.subr.bf16.mxu0 0
    %95 = vmatpush1.bf16.msra.mxu0 0
    %96 = vmatprep.subr.bf16.mxu0 0
    %97 = vmatpush1.bf16.msra.mxu0 0
    %98 = vmatprep.subr.bf16.mxu0 0
    %99 = vmatpush1.bf16.msra.mxu0 0
    %100 = vmatprep.subr.bf16.mxu0 0
    %101 = vmatpush1.bf16.msra.mxu0 0
    %102 = vmatprep.subr.bf16.mxu0 0
    %103 = vmatpush1.bf16.msra.mxu0 0
    %104 = vmatprep.subr.bf16.mxu0 0
    %105 = vmatpush1.bf16.msra.mxu0 0
    %106 = vmatprep.subr.bf16.mxu0 0
    %107 = vmatpush1.bf16.msra.mxu0 0
    %108 = vmatprep.subr.bf16.mxu0 0
    %109 = vmatpush1.bf16.msra.mxu0 0
    %110 = vmatprep.subr.bf16.mxu0 0
    %111 = vmatpush1.bf16.msra.mxu0 0
    %112 = vmatprep.subr.bf16.mxu0 0
    %113 = vmatpush1.bf16.msra.mxu0 0
    %114 = vmatprep.subr.bf16.mxu0 0
    %115 = vmatpush1.bf16.msra.mxu0 0
    %116 = vmatprep.subr.bf16.mxu0 0
    %117 = vmatpush1.bf16.msra.mxu0 0
    %118 = vmatprep.mubr.bf16.mxu0 0
    %119 = vmatmul.mubr.bf16.gmra.mrb[0].mxu0 %v84
    %v120 = vpop.f32.mrb[0].mxu0
    %v121 = vadd.f32 %v69, %v120
    %v122 = vpop.f32.mrb[0].mxu0
    %v123 = vpop.f32.mrb[0].mxu0
    %v124 = vpop.f32.mrb[0].mxu0
    %125 = vdwg.mxu0
    %v126 = vmax.f32 %v121, 0.0
    %s127 = scalar_lea.vmem [#allocation5], 16
    %v128 = vld [vmem:[%s127] sm:$0xf]
    %v129 = vld [vmem:[%s127 + $0x4] sm:$0xf]
    %v130 = vld [vmem:[%s127 + $0x8] sm:$0xf]
    %v131 = vld [vmem:[%s127 + $0xc] sm:$0xf]
    %v132 = vld [vmem:[#allocation7 + $0x1] sm:$0x1]
    %v133 = vpack.c.bf16 %v126, %v126
    %v134 = vlaneseq
    %v135 = vshrl.u32 %v134, 7
    %v136 = vsub.s32 0, %v135
    %v137 = vrot.slane %v132, %v136
    %v142 = vunpack.c.l.b16 %v128
    %v143 = vunpack.c.l.b16 %v129
    %v144 = vunpack.c.l.b16 %v130
    %v145 = vunpack.c.l.b16 %v131
    %v146 = vpack.c.b16 %v143, %v142
    %v147 = vpack.c.b16 %v145, %v144
    %v151 = vsel %vm82, %v133, 0
    %153 = vmatprep.subr.bf16.mxu0 0
    %154 = vmatpush1.bf16.msra.mxu0 %v146
    %155 = vmatprep.subr.bf16.mxu0 0
    %156 = vmatpush1.bf16.msra.mxu0 %v147
    %157 = vmatprep.subr.bf16.mxu0 0
    %158 = vmatpush1.bf16.msra.mxu0 0
    %159 = vmatprep.subr.bf16.mxu0 0
    %160 = vmatpush1.bf16.msra.mxu0 0
    %161 = vmatprep.subr.bf16.mxu0 0
    %162 = vmatpush1.bf16.msra.mxu0 0
    %163 = vmatprep.subr.bf16.mxu0 0
    %164 = vmatpush1.bf16.msra.mxu0 0
    %165 = vmatprep.subr.bf16.mxu0 0
    %166 = vmatpush1.bf16.msra.mxu0 0
    %167 = vmatprep.subr.bf16.mxu0 0
    %168 = vmatpush1.bf16.msra.mxu0 0
    %169 = vmatprep.subr.bf16.mxu0 0
    %170 = vmatpush1.bf16.msra.mxu0 0
    %171 = vmatprep.subr.bf16.mxu0 0
    %172 = vmatpush1.bf16.msra.mxu0 0
    %173 = vmatprep.subr.bf16.mxu0 0
    %174 = vmatpush1.bf16.msra.mxu0 0
    %175 = vmatprep.subr.bf16.mxu0 0
    %176 = vmatpush1.bf16.msra.mxu0 0
    %177 = vmatprep.subr.bf16.mxu0 0
    %178 = vmatpush1.bf16.msra.mxu0 0
    %179 = vmatprep.subr.bf16.mxu0 0
    %180 = vmatpush1.bf16.msra.mxu0 0
    %181 = vmatprep.subr.bf16.mxu0 0
    %182 = vmatpush1.bf16.msra.mxu0 0
    %183 = vmatprep.subr.bf16.mxu0 0
    %184 = vmatpush1.bf16.msra.mxu0 0
    %185 = vmatprep.mubr.bf16.mxu0 0
    %186 = vmatmul.mubr.bf16.gmra.mrb[0].mxu0 %v151
    %v187 = vpop.f32.mrb[0].mxu0
    %v188 = vadd.f32 %v137, %v187
    %v189 = vpop.f32.mrb[0].mxu0
    %v190 = vpop.f32.mrb[0].mxu0
    %v191 = vpop.f32.mrb[0].mxu0
    %192 = vdwg.mxu0
    %v193 = vmax.f32 %v188, 0.0
    %s194 = scalar_lea.vmem [#allocation5], 32
    %v195 = vld [vmem:[%s194] sm:$0xf]
    %v196 = vld [vmem:[%s194 + $0x4] sm:$0xf]
    %v197 = vld [vmem:[%s194 + $0x8] sm:$0xf]
    %v198 = vld [vmem:[%s194 + $0xc] sm:$0xf]
    %v199 = vld [vmem:[#allocation7 + $0x2] sm:$0x1]
    %v200 = vpack.c.bf16 %v193, %v193
    %v201 = vlaneseq
    %v202 = vshrl.u32 %v201, 7
    %v203 = vsub.s32 0, %v202
    %v204 = vrot.slane %v199, %v203
    %v209 = vunpack.c.l.b16 %v195
    %v210 = vunpack.c.l.b16 %v196
    %v211 = vunpack.c.l.b16 %v197
    %v212 = vunpack.c.l.b16 %v198
    %v213 = vpack.c.b16 %v210, %v209
    %v214 = vpack.c.b16 %v212, %v211
    %v218 = vsel %vm82, %v200, 0
    %220 = vmatprep.subr.bf16.mxu0 0
    %221 = vmatpush1.bf16.msra.mxu0 %v213
    %222 = vmatprep.subr.bf16.mxu0 0
    %223 = vmatpush1.bf16.msra.mxu0 %v214
    %224 = vmatprep.subr.bf16.mxu0 0
    %225 = vmatpush1.bf16.msra.mxu0 0
    %226 = vmatprep.subr.bf16.mxu0 0
    %227 = vmatpush1.bf16.msra.mxu0 0
    %228 = vmatprep.subr.bf16.mxu0 0
    %229 = vmatpush1.bf16.msra.mxu0 0
    %230 = vmatprep.subr.bf16.mxu0 0
    %231 = vmatpush1.bf16.msra.mxu0 0
    %232 = vmatprep.subr.bf16.mxu0 0
    %233 = vmatpush1.bf16.msra.mxu0 0
    %234 = vmatprep.subr.bf16.mxu0 0
    %235 = vmatpush1.bf16.msra.mxu0 0
    %236 = vmatprep.subr.bf16.mxu0 0
    %237 = vmatpush1.bf16.msra.mxu0 0
    %238 = vmatprep.subr.bf16.mxu0 0
    %239 = vmatpush1.bf16.msra.mxu0 0
    %240 = vmatprep.subr.bf16.mxu0 0
    %241 = vmatpush1.bf16.msra.mxu0 0
    %242 = vmatprep.subr.bf16.mxu0 0
    %243 = vmatpush1.bf16.msra.mxu0 0
    %244 = vmatprep.subr.bf16.mxu0 0
    %245 = vmatpush1.bf16.msra.mxu0 0
    %246 = vmatprep.subr.bf16.mxu0 0
    %247 = vmatpush1.bf16.msra.mxu0 0
    %248 = vmatprep.subr.bf16.mxu0 0
    %249 = vmatpush1.bf16.msra.mxu0 0
    %250 = vmatprep.subr.bf16.mxu0 0
    %251 = vmatpush1.bf16.msra.mxu0 0
    %252 = vmatprep.mubr.bf16.mxu0 0
    %253 = vmatmul.mubr.bf16.gmra.mrb[0].mxu0 %v218
    %v254 = vpop.f32.mrb[0].mxu0
    %v255 = vadd.f32 %v204, %v254
    %v256 = vpop.f32.mrb[0].mxu0
    %v257 = vpop.f32.mrb[0].mxu0
    %v258 = vpop.f32.mrb[0].mxu0
    %259 = vdwg.mxu0
    %v260 = vmul.f32 %v255, %v255
    %v261 = vsel %vm82, %v260, 0.0
    %262 = vadd.xlane.f32.xlu0 %v261
    %v263 = vpop.xlane.xlu0 %262
    %v264 = vmax.f32 %v263, 1e-24
    %v265 = vrsqrt.pop %v264
    %v266 = vmul.f32 %v255, %v265
    %s267 = scalar_lea.vmem [#allocation5], 48
    %v268 = vld [vmem:[%s267] sm:$0xf]
    %v269 = vld [vmem:[%s267 + $0x4] sm:$0xf]
    %v270 = vld [vmem:[%s267 + $0x8] sm:$0xf]
    %v271 = vld [vmem:[%s267 + $0xc] sm:$0xf]
    %v272 = vld [vmem:[#allocation7 + $0x3] sm:$0x1]
    %v273 = vpack.c.bf16 %v59, %v59
    %v274 = vlaneseq
    %v275 = vshrl.u32 %v274, 7
    %v276 = vsub.s32 0, %v275
    %v277 = vrot.slane %v272, %v276
    %v282 = vunpack.c.l.b16 %v268
    %v283 = vunpack.c.l.b16 %v269
    %v284 = vunpack.c.l.b16 %v270
    %v285 = vunpack.c.l.b16 %v271
    %v286 = vpack.c.b16 %v283, %v282
    %v287 = vpack.c.b16 %v285, %v284
    %v291 = vsel %vm82, %v273, 0
    %293 = vmatprep.subr.bf16.mxu0 0
    %294 = vmatpush1.bf16.msra.mxu0 %v286
    %295 = vmatprep.subr.bf16.mxu0 0
    %296 = vmatpush1.bf16.msra.mxu0 %v287
    %297 = vmatprep.subr.bf16.mxu0 0
    %298 = vmatpush1.bf16.msra.mxu0 0
    %299 = vmatprep.subr.bf16.mxu0 0
    %300 = vmatpush1.bf16.msra.mxu0 0
    %301 = vmatprep.subr.bf16.mxu0 0
    %302 = vmatpush1.bf16.msra.mxu0 0
    %303 = vmatprep.subr.bf16.mxu0 0
    %304 = vmatpush1.bf16.msra.mxu0 0
    %305 = vmatprep.subr.bf16.mxu0 0
    %306 = vmatpush1.bf16.msra.mxu0 0
    %307 = vmatprep.subr.bf16.mxu0 0
    %308 = vmatpush1.bf16.msra.mxu0 0
    %309 = vmatprep.subr.bf16.mxu0 0
    %310 = vmatpush1.bf16.msra.mxu0 0
    %311 = vmatprep.subr.bf16.mxu0 0
    %312 = vmatpush1.bf16.msra.mxu0 0
    %313 = vmatprep.subr.bf16.mxu0 0
    %314 = vmatpush1.bf16.msra.mxu0 0
    %315 = vmatprep.subr.bf16.mxu0 0
    %316 = vmatpush1.bf16.msra.mxu0 0
    %317 = vmatprep.subr.bf16.mxu0 0
    %318 = vmatpush1.bf16.msra.mxu0 0
    %319 = vmatprep.subr.bf16.mxu0 0
    %320 = vmatpush1.bf16.msra.mxu0 0
    %321 = vmatprep.subr.bf16.mxu0 0
    %322 = vmatpush1.bf16.msra.mxu0 0
    %323 = vmatprep.subr.bf16.mxu0 0
    %324 = vmatpush1.bf16.msra.mxu0 0
    %325 = vmatprep.mubr.bf16.mxu0 0
    %326 = vmatmul.mubr.bf16.gmra.mrb[0].mxu0 %v291
    %v327 = vpop.f32.mrb[0].mxu0
    %v328 = vadd.f32 %v277, %v327
    %v329 = vpop.f32.mrb[0].mxu0
    %v330 = vpop.f32.mrb[0].mxu0
    %v331 = vpop.f32.mrb[0].mxu0
    %332 = vdwg.mxu0
    %v333 = vmax.f32 %v328, 0.0
    %s334 = scalar_lea.vmem [#allocation5], 64
    %v335 = vld [vmem:[%s334] sm:$0xf]
    %v336 = vld [vmem:[%s334 + $0x4] sm:$0xf]
    %v337 = vld [vmem:[%s334 + $0x8] sm:$0xf]
    %v338 = vld [vmem:[%s334 + $0xc] sm:$0xf]
    %v339 = vld [vmem:[#allocation7 + $0x4] sm:$0x1]
    %v340 = vpack.c.bf16 %v333, %v333
    %v341 = vlaneseq
    %v342 = vshrl.u32 %v341, 7
    %v343 = vsub.s32 0, %v342
    %v344 = vrot.slane %v339, %v343
    %v349 = vunpack.c.l.b16 %v335
    %v350 = vunpack.c.l.b16 %v336
    %v351 = vunpack.c.l.b16 %v337
    %v352 = vunpack.c.l.b16 %v338
    %v353 = vpack.c.b16 %v350, %v349
    %v354 = vpack.c.b16 %v352, %v351
    %v358 = vsel %vm82, %v340, 0
    %360 = vmatprep.subr.bf16.mxu0 0
    %361 = vmatpush1.bf16.msra.mxu0 %v353
    %362 = vmatprep.subr.bf16.mxu0 0
    %363 = vmatpush1.bf16.msra.mxu0 %v354
    %364 = vmatprep.subr.bf16.mxu0 0
    %365 = vmatpush1.bf16.msra.mxu0 0
    %366 = vmatprep.subr.bf16.mxu0 0
    %367 = vmatpush1.bf16.msra.mxu0 0
    %368 = vmatprep.subr.bf16.mxu0 0
    %369 = vmatpush1.bf16.msra.mxu0 0
    %370 = vmatprep.subr.bf16.mxu0 0
    %371 = vmatpush1.bf16.msra.mxu0 0
    %372 = vmatprep.subr.bf16.mxu0 0
    %373 = vmatpush1.bf16.msra.mxu0 0
    %374 = vmatprep.subr.bf16.mxu0 0
    %375 = vmatpush1.bf16.msra.mxu0 0
    %376 = vmatprep.subr.bf16.mxu0 0
    %377 = vmatpush1.bf16.msra.mxu0 0
    %378 = vmatprep.subr.bf16.mxu0 0
    %379 = vmatpush1.bf16.msra.mxu0 0
    %380 = vmatprep.subr.bf16.mxu0 0
    %381 = vmatpush1.bf16.msra.mxu0 0
    %382 = vmatprep.subr.bf16.mxu0 0
    %383 = vmatpush1.bf16.msra.mxu0 0
    %384 = vmatprep.subr.bf16.mxu0 0
    %385 = vmatpush1.bf16.msra.mxu0 0
    %386 = vmatprep.subr.bf16.mxu0 0
    %387 = vmatpush1.bf16.msra.mxu0 0
    %388 = vmatprep.subr.bf16.mxu0 0
    %389 = vmatpush1.bf16.msra.mxu0 0
    %390 = vmatprep.subr.bf16.mxu0 0
    %391 = vmatpush1.bf16.msra.mxu0 0
    %392 = vmatprep.mubr.bf16.mxu0 0
    %393 = vmatmul.mubr.bf16.gmra.mrb[0].mxu0 %v358
    %v394 = vpop.f32.mrb[0].mxu0
    %v395 = vadd.f32 %v344, %v394
    %v396 = vpop.f32.mrb[0].mxu0
    %v397 = vpop.f32.mrb[0].mxu0
    %v398 = vpop.f32.mrb[0].mxu0
    %399 = vdwg.mxu0
    %v400 = vmax.f32 %v395, 0.0
    %s401 = scalar_lea.vmem [#allocation5], 80
    %v402 = vld [vmem:[%s401] sm:$0xf]
    %v403 = vld [vmem:[%s401 + $0x4] sm:$0xf]
    %v404 = vld [vmem:[%s401 + $0x8] sm:$0xf]
    %v405 = vld [vmem:[%s401 + $0xc] sm:$0xf]
    %v406 = vld [vmem:[#allocation7 + $0x5] sm:$0x1]
    %v407 = vpack.c.bf16 %v400, %v400
    %v408 = vlaneseq
    %v409 = vshrl.u32 %v408, 7
    %v410 = vsub.s32 0, %v409
    %v411 = vrot.slane %v406, %v410
    %v416 = vunpack.c.l.b16 %v402
    %v417 = vunpack.c.l.b16 %v403
    %v418 = vunpack.c.l.b16 %v404
    %v419 = vunpack.c.l.b16 %v405
    %v420 = vpack.c.b16 %v417, %v416
    %v421 = vpack.c.b16 %v419, %v418
    %v425 = vsel %vm82, %v407, 0
    %427 = vmatprep.subr.bf16.mxu0 0
    %428 = vmatpush1.bf16.msra.mxu0 %v420
    %429 = vmatprep.subr.bf16.mxu0 0
    %430 = vmatpush1.bf16.msra.mxu0 %v421
    %431 = vmatprep.subr.bf16.mxu0 0
    %432 = vmatpush1.bf16.msra.mxu0 0
    %433 = vmatprep.subr.bf16.mxu0 0
    %434 = vmatpush1.bf16.msra.mxu0 0
    %435 = vmatprep.subr.bf16.mxu0 0
    %436 = vmatpush1.bf16.msra.mxu0 0
    %437 = vmatprep.subr.bf16.mxu0 0
    %438 = vmatpush1.bf16.msra.mxu0 0
    %439 = vmatprep.subr.bf16.mxu0 0
    %440 = vmatpush1.bf16.msra.mxu0 0
    %441 = vmatprep.subr.bf16.mxu0 0
    %442 = vmatpush1.bf16.msra.mxu0 0
    %443 = vmatprep.subr.bf16.mxu0 0
    %444 = vmatpush1.bf16.msra.mxu0 0
    %445 = vmatprep.subr.bf16.mxu0 0
    %446 = vmatpush1.bf16.msra.mxu0 0
    %447 = vmatprep.subr.bf16.mxu0 0
    %448 = vmatpush1.bf16.msra.mxu0 0
    %449 = vmatprep.subr.bf16.mxu0 0
    %450 = vmatpush1.bf16.msra.mxu0 0
    %451 = vmatprep.subr.bf16.mxu0 0
    %452 = vmatpush1.bf16.msra.mxu0 0
    %453 = vmatprep.subr.bf16.mxu0 0
    %454 = vmatpush1.bf16.msra.mxu0 0
    %455 = vmatprep.subr.bf16.mxu0 0
    %456 = vmatpush1.bf16.msra.mxu0 0
    %457 = vmatprep.subr.bf16.mxu0 0
    %458 = vmatpush1.bf16.msra.mxu0 0
    %459 = vmatprep.mubr.bf16.mxu0 0
    %460 = vmatmul.mubr.bf16.gmra.mrb[0].mxu0 %v425
    %v461 = vpop.f32.mrb[0].mxu0
    %v462 = vadd.f32 %v411, %v461
    %v463 = vpop.f32.mrb[0].mxu0
    %v464 = vpop.f32.mrb[0].mxu0
    %v465 = vpop.f32.mrb[0].mxu0
    %466 = vdwg.mxu0
    %v467 = vmul.f32 %v462, %v462
    %v468 = vsel %vm82, %v467, 0.0
    %469 = vadd.xlane.f32.xlu0 %v468
    %v470 = vpop.xlane.xlu0 %469
    %v471 = vmax.f32 %v470, 1e-24
    %v472 = vrsqrt.pop %v471
    %v473 = vmul.f32 %v462, %v472
    %v475 = vsel %vm82, %v266, 0
    %v478 = vsel %vm82, %v473, 0
    %480 = vmatprep.subr.mxu0 0.0
    %481 = vmatpush1.xpose.msra.mxu0 %v478
    %482 = vmatprep.subr.mxu0 0.0
    %483 = vmatpush1.xpose.msra.mxu0 0.0
    %484 = vmatprep.subr.mxu0 0.0
    %485 = vmatpush1.xpose.msra.mxu0 0.0
    %486 = vmatprep.subr.mxu0 0.0
    %487 = vmatpush1.xpose.msra.mxu0 0.0
    %488 = vmatprep.subr.mxu0 0.0
    %489 = vmatpush1.xpose.msra.mxu0 0.0
    %490 = vmatprep.subr.mxu0 0.0
    %491 = vmatpush1.xpose.msra.mxu0 0.0
    %492 = vmatprep.subr.mxu0 0.0
    %493 = vmatpush1.xpose.msra.mxu0 0.0
    %494 = vmatprep.subr.mxu0 0.0
    %495 = vmatpush1.xpose.msra.mxu0 0.0
    %496 = vmatprep.subr.mxu0 0.0
    %497 = vmatpush1.xpose.msra.mxu0 0.0
    %498 = vmatprep.subr.mxu0 0.0
    %499 = vmatpush1.xpose.msra.mxu0 0.0
    %500 = vmatprep.subr.mxu0 0.0
    %501 = vmatpush1.xpose.msra.mxu0 0.0
    %502 = vmatprep.subr.mxu0 0.0
    %503 = vmatpush1.xpose.msra.mxu0 0.0
    %504 = vmatprep.subr.mxu0 0.0
    %505 = vmatpush1.xpose.msra.mxu0 0.0
    %506 = vmatprep.subr.mxu0 0.0
    %507 = vmatpush1.xpose.msra.mxu0 0.0
    %508 = vmatprep.subr.mxu0 0.0
    %509 = vmatpush1.xpose.msra.mxu0 0.0
    %510 = vmatprep.subr.mxu0 0.0
    %511 = vmatpush1.xpose.msra.mxu0 0.0
    %512 = vmatprep.subr.mxu0 0.0
    %513 = vmatpush1.xpose.msra.mxu0 0.0
    %514 = vmatprep.subr.mxu0 0.0
    %515 = vmatpush1.xpose.msra.mxu0 0.0
    %516 = vmatprep.subr.mxu0 0.0
    %517 = vmatpush1.xpose.msra.mxu0 0.0
    %518 = vmatprep.subr.mxu0 0.0
    %519 = vmatpush1.xpose.msra.mxu0 0.0
    %520 = vmatprep.subr.mxu0 0.0
    %521 = vmatpush1.xpose.msra.mxu0 0.0
    %522 = vmatprep.subr.mxu0 0.0
    %523 = vmatpush1.xpose.msra.mxu0 0.0
    %524 = vmatprep.subr.mxu0 0.0
    %525 = vmatpush1.xpose.msra.mxu0 0.0
    %526 = vmatprep.subr.mxu0 0.0
    %527 = vmatpush1.xpose.msra.mxu0 0.0
    %528 = vmatprep.subr.mxu0 0.0
    %529 = vmatpush1.xpose.msra.mxu0 0.0
    %530 = vmatprep.subr.mxu0 0.0
    %531 = vmatpush1.xpose.msra.mxu0 0.0
    %532 = vmatprep.subr.mxu0 0.0
    %533 = vmatpush1.xpose.msra.mxu0 0.0
    %534 = vmatprep.subr.mxu0 0.0
    %535 = vmatpush1.xpose.msra.mxu0 0.0
    %536 = vmatprep.subr.mxu0 0.0
    %537 = vmatpush1.xpose.msra.mxu0 0.0
    %538 = vmatprep.subr.mxu0 0.0
    %539 = vmatpush1.xpose.msra.mxu0 0.0
    %540 = vmatprep.subr.mxu0 0.0
    %541 = vmatpush1.xpose.msra.mxu0 0.0
    %542 = vmatprep.subr.mxu0 0.0
    %543 = vmatpush1.xpose.msra.mxu0 0.0
    %544 = vmatprep.mubr.f32.mxu0 0.0
    %545 = vmatmul.mubr.f32.gmra.mrb[0].mxu0 %v475
    %v546 = vpop.f32.mrb[0].mxu0
    %v547 = vadd.f32 0.0, %v546
    %v548 = vpop.f32.mrb[0].mxu0
    %549 = vdwg.mxu0
    %v550 = vmul.f32 %v547, 2.0
    %551 = vmatprep.subr.mxu0 0.0
    %552 = vmatpush1.xpose.msra.mxu0 %v475
    %553 = vmatprep.subr.mxu0 0.0
    %554 = vmatpush1.xpose.msra.mxu0 0.0
    %555 = vmatprep.subr.mxu0 0.0
    %556 = vmatpush1.xpose.msra.mxu0 0.0
    %557 = vmatprep.subr.mxu0 0.0
    %558 = vmatpush1.xpose.msra.mxu0 0.0
    %559 = vmatprep.subr.mxu0 0.0
    %560 = vmatpush1.xpose.msra.mxu0 0.0
    %561 = vmatprep.subr.mxu0 0.0
    %562 = vmatpush1.xpose.msra.mxu0 0.0
    %563 = vmatprep.subr.mxu0 0.0
    %564 = vmatpush1.xpose.msra.mxu0 0.0
    %565 = vmatprep.subr.mxu0 0.0
    %566 = vmatpush1.xpose.msra.mxu0 0.0
    %567 = vmatprep.subr.mxu0 0.0
    %568 = vmatpush1.xpose.msra.mxu0 0.0
    %569 = vmatprep.subr.mxu0 0.0
    %570 = vmatpush1.xpose.msra.mxu0 0.0
    %571 = vmatprep.subr.mxu0 0.0
    %572 = vmatpush1.xpose.msra.mxu0 0.0
    %573 = vmatprep.subr.mxu0 0.0
    %574 = vmatpush1.xpose.msra.mxu0 0.0
    %575 = vmatprep.subr.mxu0 0.0
    %576 = vmatpush1.xpose.msra.mxu0 0.0
    %577 = vmatprep.subr.mxu0 0.0
    %578 = vmatpush1.xpose.msra.mxu0 0.0
    %579 = vmatprep.subr.mxu0 0.0
    %580 = vmatpush1.xpose.msra.mxu0 0.0
    %581 = vmatprep.subr.mxu0 0.0
    %582 = vmatpush1.xpose.msra.mxu0 0.0
    %583 = vmatprep.subr.mxu0 0.0
    %584 = vmatpush1.xpose.msra.mxu0 0.0
    %585 = vmatprep.subr.mxu0 0.0
    %586 = vmatpush1.xpose.msra.mxu0 0.0
    %587 = vmatprep.subr.mxu0 0.0
    %588 = vmatpush1.xpose.msra.mxu0 0.0
    %589 = vmatprep.subr.mxu0 0.0
    %590 = vmatpush1.xpose.msra.mxu0 0.0
    %591 = vmatprep.subr.mxu0 0.0
    %592 = vmatpush1.xpose.msra.mxu0 0.0
    %593 = vmatprep.subr.mxu0 0.0
    %594 = vmatpush1.xpose.msra.mxu0 0.0
    %595 = vmatprep.subr.mxu0 0.0
    %596 = vmatpush1.xpose.msra.mxu0 0.0
    %597 = vmatprep.subr.mxu0 0.0
    %598 = vmatpush1.xpose.msra.mxu0 0.0
    %599 = vmatprep.subr.mxu0 0.0
    %600 = vmatpush1.xpose.msra.mxu0 0.0
    %601 = vmatprep.subr.mxu0 0.0
    %602 = vmatpush1.xpose.msra.mxu0 0.0
    %603 = vmatprep.subr.mxu0 0.0
    %604 = vmatpush1.xpose.msra.mxu0 0.0
    %605 = vmatprep.subr.mxu0 0.0
    %606 = vmatpush1.xpose.msra.mxu0 0.0
    %607 = vmatprep.subr.mxu0 0.0
    %608 = vmatpush1.xpose.msra.mxu0 0.0
    %609 = vmatprep.subr.mxu0 0.0
    %610 = vmatpush1.xpose.msra.mxu0 0.0
    %611 = vmatprep.subr.mxu0 0.0
    %612 = vmatpush1.xpose.msra.mxu0 0.0
    %613 = vmatprep.subr.mxu0 0.0
    %614 = vmatpush1.xpose.msra.mxu0 0.0
    %615 = vmatprep.mubr.f32.mxu0 0.0
    %616 = vmatmul.mubr.f32.gmra.mrb[0].mxu0 %v475
    %v617 = vpop.f32.mrb[0].mxu0
    %v618 = vadd.f32 0.0, %v617
    %v619 = vpop.f32.mrb[0].mxu0
    %620 = vdwg.mxu0
    %v621 = vmul.f32 %v618, 2.0
    %622 = vmatprep.subr.mxu0 0.0
    %623 = vmatpush1.xpose.msra.mxu0 %v478
    %624 = vmatprep.subr.mxu0 0.0
    %625 = vmatpush1.xpose.msra.mxu0 0.0
    %626 = vmatprep.subr.mxu0 0.0
    %627 = vmatpush1.xpose.msra.mxu0 0.0
    %628 = vmatprep.subr.mxu0 0.0
    %629 = vmatpush1.xpose.msra.mxu0 0.0
    %630 = vmatprep.subr.mxu0 0.0
    %631 = vmatpush1.xpose.msra.mxu0 0.0
    %632 = vmatprep.subr.mxu0 0.0
    %633 = vmatpush1.xpose.msra.mxu0 0.0
    %634 = vmatprep.subr.mxu0 0.0
    %635 = vmatpush1.xpose.msra.mxu0 0.0
    %636 = vmatprep.subr.mxu0 0.0
    %637 = vmatpush1.xpose.msra.mxu0 0.0
    %638 = vmatprep.subr.mxu0 0.0
    %639 = vmatpush1.xpose.msra.mxu0 0.0
    %640 = vmatprep.subr.mxu0 0.0
    %641 = vmatpush1.xpose.msra.mxu0 0.0
    %642 = vmatprep.subr.mxu0 0.0
    %643 = vmatpush1.xpose.msra.mxu0 0.0
    %644 = vmatprep.subr.mxu0 0.0
    %645 = vmatpush1.xpose.msra.mxu0 0.0
    %646 = vmatprep.subr.mxu0 0.0
    %647 = vmatpush1.xpose.msra.mxu0 0.0
    %648 = vmatprep.subr.mxu0 0.0
    %649 = vmatpush1.xpose.msra.mxu0 0.0
    %650 = vmatprep.subr.mxu0 0.0
    %651 = vmatpush1.xpose.msra.mxu0 0.0
    %652 = vmatprep.subr.mxu0 0.0
    %653 = vmatpush1.xpose.msra.mxu0 0.0
    %654 = vmatprep.subr.mxu0 0.0
    %655 = vmatpush1.xpose.msra.mxu0 0.0
    %656 = vmatprep.subr.mxu0 0.0
    %657 = vmatpush1.xpose.msra.mxu0 0.0
    %658 = vmatprep.subr.mxu0 0.0
    %659 = vmatpush1.xpose.msra.mxu0 0.0
    %660 = vmatprep.subr.mxu0 0.0
    %661 = vmatpush1.xpose.msra.mxu0 0.0
    %662 = vmatprep.subr.mxu0 0.0
    %663 = vmatpush1.xpose.msra.mxu0 0.0
    %664 = vmatprep.subr.mxu0 0.0
    %665 = vmatpush1.xpose.msra.mxu0 0.0
    %666 = vmatprep.subr.mxu0 0.0
    %667 = vmatpush1.xpose.msra.mxu0 0.0
    %668 = vmatprep.subr.mxu0 0.0
    %669 = vmatpush1.xpose.msra.mxu0 0.0
    %670 = vmatprep.subr.mxu0 0.0
    %671 = vmatpush1.xpose.msra.mxu0 0.0
    %672 = vmatprep.subr.mxu0 0.0
    %673 = vmatpush1.xpose.msra.mxu0 0.0
    %674 = vmatprep.subr.mxu0 0.0
    %675 = vmatpush1.xpose.msra.mxu0 0.0
    %676 = vmatprep.subr.mxu0 0.0
    %677 = vmatpush1.xpose.msra.mxu0 0.0
    %678 = vmatprep.subr.mxu0 0.0
    %679 = vmatpush1.xpose.msra.mxu0 0.0
    %680 = vmatprep.subr.mxu0 0.0
    %681 = vmatpush1.xpose.msra.mxu0 0.0
    %682 = vmatprep.subr.mxu0 0.0
    %683 = vmatpush1.xpose.msra.mxu0 0.0
    %684 = vmatprep.subr.mxu0 0.0
    %685 = vmatpush1.xpose.msra.mxu0 0.0
    %686 = vmatprep.mubr.f32.mxu0 0.0
    %687 = vmatmul.mubr.f32.gmra.mrb[0].mxu0 %v478
    %v688 = vpop.f32.mrb[0].mxu0
    %v689 = vadd.f32 0.0, %v688
    %v690 = vpop.f32.mrb[0].mxu0
    %691 = vdwg.mxu0
    %v692 = vmul.f32 %v689, 2.0
    %v693 = vmul.f32 %v550, 1.442695
    %v694 = vpow.pop %v693
    %vm695 = vcmask 64512
    %v696 = vsel %vm695, %v694, 0.0
    %697 = vadd.xlane.f32.xlu0 %v696
    %v698 = vpop.xlane.xlu0 %697
    %699 = vxpose.xlu0.b32.start [1/16] %v694, 128
    %700 = vxpose.xlu0.b32.cont [2/16] 0.0, 128
    %701 = vxpose.xlu0.b32.cont [3/16] 0.0, 128
    %702 = vxpose.xlu0.b32.cont [4/16] 0.0, 128
    %703 = vxpose.xlu0.b32.cont [5/16] 0.0, 128
    %704 = vxpose.xlu0.b32.cont [6/16] 0.0, 128
    %705 = vxpose.xlu0.b32.cont [7/16] 0.0, 128
    %706 = vxpose.xlu0.b32.cont [8/16] 0.0, 128
    %707 = vxpose.xlu0.b32.cont [9/16] 0.0, 128
    %708 = vxpose.xlu0.b32.cont [10/16] 0.0, 128
    %709 = vxpose.xlu0.b32.cont [11/16] 0.0, 128
    %710 = vxpose.xlu0.b32.cont [12/16] 0.0, 128
    %711 = vxpose.xlu0.b32.cont [13/16] 0.0, 128
    %712 = vxpose.xlu0.b32.cont [14/16] 0.0, 128
    %713 = vxpose.xlu0.b32.cont [15/16] 0.0, 128
    %714 = vxpose.xlu0.b32.end [16/16] 0.0, 128
    %v715 = vpop.trf.xlu0
    %v716 = vpop.trf.xlu0
    %v717 = vpop.trf.xlu0
    %v718 = vpop.trf.xlu0
    %v719 = vpop.trf.xlu0
    %v720 = vpop.trf.xlu0
    %v721 = vpop.trf.xlu0
    %v722 = vpop.trf.xlu0
    %v723 = vpop.trf.xlu0
    %v724 = vpop.trf.xlu0
    %v725 = vpop.trf.xlu0
    %v726 = vpop.trf.xlu0
    %v727 = vpop.trf.xlu0
    %v728 = vpop.trf.xlu0
    %v729 = vpop.trf.xlu0
    %v730 = vpop.trf.xlu0
    %v732 = vsel %vm695, %v715, 0
    %734 = vmatprep.subr.mxu0 0.0
    %735 = vmatpush1.msra.mxu0 1.0
    %736 = vmatprep.subr.mxu0 0.0
    %737 = vmatpush1.msra.mxu0 0.0
    %738 = vmatprep.subr.mxu0 0.0
    %739 = vmatpush1.msra.mxu0 0.0
    %740 = vmatprep.subr.mxu0 0.0
    %741 = vmatpush1.msra.mxu0 0.0
    %742 = vmatprep.subr.mxu0 0.0
    %743 = vmatpush1.msra.mxu0 0.0
    %744 = vmatprep.subr.mxu0 0.0
    %745 = vmatpush1.msra.mxu0 0.0
    %746 = vmatprep.subr.mxu0 0.0
    %747 = vmatpush1.msra.mxu0 0.0
    %748 = vmatprep.subr.mxu0 0.0
    %749 = vmatpush1.msra.mxu0 0.0
    %750 = vmatprep.subr.mxu0 0.0
    %751 = vmatpush1.msra.mxu0 0.0
    %752 = vmatprep.subr.mxu0 0.0
    %753 = vmatpush1.msra.mxu0 0.0
    %754 = vmatprep.subr.mxu0 0.0
    %755 = vmatpush1.msra.mxu0 0.0
    %756 = vmatprep.subr.mxu0 0.0
    %757 = vmatpush1.msra.mxu0 0.0
    %758 = vmatprep.subr.mxu0 0.0
    %759 = vmatpush1.msra.mxu0 0.0
    %760 = vmatprep.subr.mxu0 0.0
    %761 = vmatpush1.msra.mxu0 0.0
    %762 = vmatprep.subr.mxu0 0.0
    %763 = vmatpush1.msra.mxu0 0.0
    %764 = vmatprep.subr.mxu0 0.0
    %765 = vmatpush1.msra.mxu0 0.0
    %766 = vmatprep.subr.mxu0 0.0
    %767 = vmatpush1.msra.mxu0 0.0
    %768 = vmatprep.subr.mxu0 0.0
    %769 = vmatpush1.msra.mxu0 0.0
    %770 = vmatprep.subr.mxu0 0.0
    %771 = vmatpush1.msra.mxu0 0.0
    %772 = vmatprep.subr.mxu0 0.0
    %773 = vmatpush1.msra.mxu0 0.0
    %774 = vmatprep.subr.mxu0 0.0
    %775 = vmatpush1.msra.mxu0 0.0
    %776 = vmatprep.subr.mxu0 0.0
    %777 = vmatpush1.msra.mxu0 0.0
    %778 = vmatprep.subr.mxu0 0.0
    %779 = vmatpush1.msra.mxu0 0.0
    %780 = vmatprep.subr.mxu0 0.0
    %781 = vmatpush1.msra.mxu0 0.0
    %782 = vmatprep.subr.mxu0 0.0
    %783 = vmatpush1.msra.mxu0 0.0
    %784 = vmatprep.subr.mxu0 0.0
    %785 = vmatpush1.msra.mxu0 0.0
    %786 = vmatprep.subr.mxu0 0.0
    %787 = vmatpush1.msra.mxu0 0.0
    %788 = vmatprep.subr.mxu0 0.0
    %789 = vmatpush1.msra.mxu0 0.0
    %790 = vmatprep.subr.mxu0 0.0
    %791 = vmatpush1.msra.mxu0 0.0
    %792 = vmatprep.subr.mxu0 0.0
    %793 = vmatpush1.msra.mxu0 0.0
    %794 = vmatprep.subr.mxu0 0.0
    %795 = vmatpush1.msra.mxu0 0.0
    %796 = vmatprep.subr.mxu0 0.0
    %797 = vmatpush1.msra.mxu0 0.0
    %798 = vmatprep.mubr.f32.mxu0 0.0
    %799 = vmatmul.mubr.f32.gmra.mrb[0].mxu0 %v732
    %v800 = vpop.f32.mrb[0].mxu0
    %v801 = vadd.f32 0.0, %v800
    %v802 = vpop.f32.mrb[0].mxu0
    %803 = vdwg.mxu0
    %v804 = vmul.f32 %v266, %v266
    %v805 = vsel %vm82, %v804, 0.0
    %806 = vadd.xlane.f32.xlu0 %v805
    %v807 = vpop.xlane.xlu0 %806
    %v808 = vmul.f32 %v807, 2.0
    %v809 = vmul.f32 %v473, %v473
    %v810 = vsel %vm82, %v809, 0.0
    %811 = vadd.xlane.f32.xlu0 %v810
    %v812 = vpop.xlane.xlu0 %811
    %v813 = vmul.f32 %v812, 2.0
    %v814 = vmul.f32 %v621, 1.442695
    %v815 = vpow.pop %v814
    %v816 = vsel %vm695, %v815, 0.0
    %817 = vadd.xlane.f32.xlu0 %v816
    %v818 = vpop.xlane.xlu0 %817
    %v819 = vmul.f32 %v808, 1.442695
    %v820 = vpow.pop %v819
    %v821 = vsub.f32 %v818, %v820
    %v822 = vmul.f32 %v692, 1.442695
    %v823 = vpow.pop %v822
    %v824 = vsel %vm695, %v823, 0.0
    %825 = vadd.xlane.f32.xlu0 %v824
    %v826 = vpop.xlane.xlu0 %825
    %v827 = vmul.f32 %v813, 1.442695
    %v828 = vpow.pop %v827
    %v829 = vsub.f32 %v826, %v828
    %v830 = vmul.f32 %v266, %v473
    %v831 = vsel %vm82, %v830, 0.0
    %832 = vadd.xlane.f32.xlu0 %v831
    %v833 = vpop.xlane.xlu0 %832
    %v834 = vrot.slane %v833, 4
    %v835 = vadd.f32 %v833, %v834
    %v836 = vrot.slane %v835, 2
    %v837 = vadd.f32 %v835, %v836
    %v838 = vrot.slane %v837, 1
    %v839 = vadd.f32 %v837, %v838
    %s840 = vtos %v839
    %v841 = vstv %s840
    %v842 = vmul.f32 %v841, 2.0
    %v843 = vadd.f32 %v821, %v698
    %v844 = vlog2.pop %v843
    %v845 = vmul.f32 %v844, 0.6931472
    %vm846 = vcmask 7168
    %v847 = vsel %vm846, %v845, 0.0
    %848 = vadd.xlane.f32.xlu0 %v847
    %v849 = vpop.xlane.xlu0 %848
    %v850 = vrot.slane %v849, 4
    %v851 = vadd.f32 %v849, %v850
    %v852 = vrot.slane %v851, 2
    %v853 = vadd.f32 %v851, %v852
    %v854 = vrot.slane %v853, 1
    %v855 = vadd.f32 %v853, %v854
    %s856 = vtos %v855
    %v857 = vstv %s856
    %v858 = vadd.f32 %v829, %v801
    %v859 = vlog2.pop %v858
    %v860 = vmul.f32 %v859, 0.6931472
    %v861 = vsel %vm846, %v860, 0.0
    %862 = vadd.xlane.f32.xlu0 %v861
    %v863 = vpop.xlane.xlu0 %862
    %v864 = vrot.slane %v863, 4
    %v865 = vadd.f32 %v863, %v864
    %v866 = vrot.slane %v865, 2
    %v867 = vadd.f32 %v865, %v866
    %v868 = vrot.slane %v867, 1
    %v869 = vadd.f32 %v867, %v868
    %s870 = vtos %v869
    %v871 = vstv %s870
    %v872 = vadd.f32 %v857, %v871
    %v873 = vmul.f32 %v842, 2.0
    %v874 = vsub.f32 %v872, %v873
    %v875 = vmul.f32 %v874, 0.0625
    %vm876 = vcmask 0
    %877 = vst.msk [vmem:[#allocation8] sm:$0x1] %vm876, %v875
    // Predicated region
    $region26: #{tpu_custom_call.1} parent=1 // pred_check
      _
    $region27: #{tpu_custom_call.1} parent=1 // pred_check_branch
      %879 = sbr.rel (0) target = $region29
    $region28: #{tpu_custom_call.1} parent=1 // pred_region
      %s881 = ssub.s32 16, 16
      %882 = vsyncadd [#allocation4], %s881
      %s884 = sshll.u32 [#allocation8], 4
      %s885 = int_to_ptr.vmem [resolvable:$true] %s884
      %887 = dma.vmem_to_hbm [thread:$0]  %s885, 16, %s3, [#allocation4]
    $region29: #{tpu_custom_call.1} parent=1 // pred_fallthru
      _
    // Predicated region
    $region30: #{tpu_custom_call.1} parent=1 // pred_check
      _
    $region31: #{tpu_custom_call.1} parent=1 // pred_check_branch
      %889 = sbr.rel (0) target = $region33
    $region32: #{tpu_custom_call.1} parent=1 // pred_region
      %890 = dma.done [#allocation4], 16
    $region33: #{tpu_custom_call.1} parent=1 // pred_fallthru
      _
    %891 = vsyncpa [#allocation3], 1
    %892 = vsyncpa [#allocation6], 1
    %893 = vsyncpa [#allocation4], 1

</llo_original>
